<compile_context>
chip_gen: v7x
topology: tpu7x:2x2x1
jax: 0.10.0
libtpu: 0.0.40
codegen_flags: <defaults>
</compile_context>

<pallas_src>
import jax
import jax.numpy as jnp
from jax.experimental import pallas as pl
from jax.experimental.pallas import tpu as pltpu

LANE = 128                       # vreg lane width
_ACT_VMEM_BUDGET = 10 * 2**20    # cap for double-buffered activation tiles
_VMEM_LIMIT_CAP = 64 * 2**20     # never request more scoped VMEM than v7x has


def _round_up(n, m):
    return ((n + m - 1) // m) * m


def _sublane(dtype):
    # Native sublane multiple for a packed dtype (f32: 8, bf16: 16, int8: 32).
    return max(8, 32 // jnp.dtype(dtype).itemsize)


def _vmem_tile_bytes(rows, cols, dtype):
    # VMEM footprint of a (rows, cols) tile after (sublane, lane) layout padding.
    isz = jnp.dtype(dtype).itemsize
    return (_round_up(max(int(rows), 1), _sublane(dtype))
            * _round_up(max(int(cols), 1), LANE) * isz)


# -----------------------------------------------------------------------------
# Kernel: o = relu(x @ W1 + b1) @ W2 + b2, fully fused; hidden stays on-chip.
# -----------------------------------------------------------------------------
def stimnet_kernel(x_ref, w1_ref, b1_ref, w2_ref, b2_ref, o_ref):
    # Cast x to the MXU operand dtype in-register (no wrapper-side HBM pass).
    x = x_ref[...].astype(w1_ref.dtype)
    # fc1 on the MXU, f32 accumulation regardless of operand dtype.
    a = jnp.dot(x, w1_ref[...], preferred_element_type=jnp.float32)
    # Bias-add + ReLU in f32 on the VPU (portable across v5e/v6e/v7x).
    a = jnp.maximum(a + b1_ref[...], 0.0)
    # fc2: activations fed at the weights' dtype (bf16 on the bf16 path - a
    # deliberate, documented precision choice; no-op on f32), f32 accumulation.
    y = jnp.dot(a.astype(w2_ref.dtype), w2_ref[...],
                preferred_element_type=jnp.float32)
    o_ref[...] = (y + b2_ref[...]).astype(o_ref.dtype)


# -----------------------------------------------------------------------------
# One-time parameter preparation (NOT in the per-call hot path).
# -----------------------------------------------------------------------------
def prepare_stimnet_params(fc1_w, fc1_b, fc2_w, fc2_b, *, use_bf16=False):
    """Convert PyTorch-layout Linear parameters to kernel layout, once.

    fc1_w: (h, xdim), fc1_b: (h,), fc2_w: (ydim, h), fc2_b: (ydim,) [PyTorch].
    Returns {"w1": (xdim, h), "b1": (1, h), "w2": (h, ydim), "b2": (1, ydim)}.
    MXU operands are cast to bf16 when use_bf16=True (f32 accumulation in the
    kernel); biases stay f32 because bias-add/ReLU run on the VPU in f32.
    The bf16 operand path is valid on v5e, v6e and v7x (v5e MXU is bf16-native).
    """
    mxu_dtype = jnp.bfloat16 if use_bf16 else jnp.float32
    return {
        "w1": jnp.asarray(fc1_w).T.astype(mxu_dtype),
        "b1": jnp.asarray(fc1_b).reshape(1, -1).astype(jnp.float32),
        "w2": jnp.asarray(fc2_w).T.astype(mxu_dtype),
        "b2": jnp.asarray(fc2_b).reshape(1, -1).astype(jnp.float32),
    }


# -----------------------------------------------------------------------------
# Forward wrapper.
# -----------------------------------------------------------------------------
def stimnet_forward(x, params, *, block_b=2048, out_dtype=None):
    """Fused StimNet forward. x: (..., xdim); params from prepare_stimnet_params.

    block_b: target batch-tile size for the batch-tiled path (sublane-aligned,
             load-balanced, VMEM-budget-clamped).  ~2048 amortizes the ~0.35us
             per-grid-step overhead; the budget keeps double-buffered tiles
             inside v7x's 64 MiB VMEM and v5e's 16 MiB scoped default.
    out_dtype: output dtype (default x.dtype).  bf16 output halves output HBM
             write traffic when downstream tolerates it.
    """
    w1, b1, w2, b2 = params["w1"], params["b1"], params["w2"], params["b2"]
    xdim, h = w1.shape
    ydim = w2.shape[1]
    if out_dtype is None:
        out_dtype = x.dtype

    lead = x.shape[:-1]
    x2 = x.reshape(-1, xdim)
    B = x2.shape[0]

    sub = max(_sublane(x2.dtype), _sublane(out_dtype), _sublane(w1.dtype))

    # ---- small batch: single invocation, whole operands VMEM-resident -------
    if B < 2 * sub:
        vmem = pl.BlockSpec(memory_space=pltpu.MemorySpace.VMEM)
        out = pl.pallas_call(
            stimnet_kernel,
            out_shape=jax.ShapeDtypeStruct((B, ydim), out_dtype),
            in_specs=[vmem] * 5,
            out_specs=vmem,
        )(x2, w1, b1, w2, b2)
        return out.reshape(*lead, ydim)

    # ---- batch-tiled, weight-stationary streaming path -----------------------
    # VMEM bytes one batch row costs (double-buffered x/out tiles + hidden).
    row_bytes = (2 * _round_up(xdim, LANE) * jnp.dtype(x2.dtype).itemsize
                 + 2 * _round_up(ydim, LANE) * jnp.dtype(out_dtype).itemsize
                 + _round_up(h, LANE) * 4)

    # Tile/grid selection: >=2 tiles and an even grid so v7x's two TensorCores
    # get equal work (single-TC v5e/v6e only pay ~0.35us per extra step), with
    # load-balanced tiles so the last one is not nearly empty.
    nb = max(2, pl.cdiv(B, max(block_b, sub)))
    if nb % 2:
        nb += 1
    tb = _round_up(pl.cdiv(B, nb), sub)
    tb_cap = max(sub, (_ACT_VMEM_BUDGET // max(row_bytes, 1)) // sub * sub)
    if tb > tb_cap:
        tb = tb_cap
        nb = pl.cdiv(B, tb)
        if nb % 2:
            nb += 1
    bp = tb * nb

    # Pad the batch only when it does not divide the tile.  Padded rows compute
    # relu(b1) @ W2 + b2 (NOT zero) and are sliced off below - the padded slab
    # must never be reused downstream as if it were zero-filled.
    x_in = x2 if bp == B else jnp.pad(x2, ((0, bp - B), (0, 0)))

    # Explicit scoped-VMEM limit derived from the actual tile sizes
    # (conservatively assumes double-buffered weights, 2x headroom for Mosaic
    # internal scratch, clamped to v7x's physical VMEM).
    est = (2 * _vmem_tile_bytes(tb, xdim, x2.dtype)
           + 2 * _vmem_tile_bytes(tb, ydim, out_dtype)
           + 2 * (_vmem_tile_bytes(xdim, h, w1.dtype)
                  + _vmem_tile_bytes(h, ydim, w2.dtype)
                  + _vmem_tile_bytes(1, h, jnp.float32)
                  + _vmem_tile_bytes(1, ydim, jnp.float32))
           + 3 * _vmem_tile_bytes(tb, max(xdim, h, ydim), jnp.float32))
    vmem_limit = int(min(_VMEM_LIMIT_CAP, max(8 * 2**20, 2 * est)))

    def call(weight_pipeline_mode):
        wkw = ({} if weight_pipeline_mode is None
               else {"pipeline_mode": weight_pipeline_mode})

        def wspec(shape):
            # Grid-invariant operand: same block every step -> DMA'd once and
            # kept VMEM-resident by the pipeline.
            return pl.BlockSpec(shape, lambda i: (0, 0), **wkw)

        return pl.pallas_call(
            stimnet_kernel,
            out_shape=jax.ShapeDtypeStruct((bp, ydim), out_dtype),
            grid=(nb,),
            in_specs=[
                pl.BlockSpec((tb, xdim), lambda i: (i, 0)),   # streamed over B
                wspec((xdim, h)),
                wspec((1, h)),
                wspec((h, ydim)),
                wspec((1, ydim)),
            ],
            out_specs=pl.BlockSpec((tb, ydim), lambda i: (i, 0)),
            compiler_params=pltpu.CompilerParams(
                dimension_semantics=("parallel",),   # megacore-shard the batch
                vmem_limit_bytes=vmem_limit),
        )(x_in, w1, b1, w2, b2)

    try:
        # Single-buffer the grid-invariant weights/biases (their index_map is
        # constant, so double-buffering them only wastes VMEM).
        out = call(pl.Buffered(1))
    except Exception:
        # Portability fallback: default (double-buffered) weight pipelining.
        out = call(None)

    if bp != B:
        out = out[:B]
    return out.reshape(*lead, ydim)


def stimnet_reference(x, fc1_w, fc1_b, fc2_w, fc2_b):
    # Pure-JAX reference in PyTorch layout: y = relu(x @ W1.T + b1) @ W2.T + b2.
    a = jnp.maximum(x @ fc1_w.T + fc1_b, 0.0)
    return a @ fc2_w.T + fc2_b


if __name__ == "__main__":
    xdim, h, ydim = 16, 32, 4
    key = jax.random.PRNGKey(0)
    kx, kw1, kb1, kw2, kb2, kx2, kx3 = jax.random.split(key, 7)

    # Deterministic PyTorch-style Linear init: U(-1/sqrt(fan_in), 1/sqrt(fan_in)).
    bound1 = 1.0 / (xdim ** 0.5)
    bound2 = 1.0 / (h ** 0.5)
    fc1_w = jax.random.uniform(kw1, (h, xdim), jnp.float32, -bound1, bound1)
    fc1_b = jax.random.uniform(kb1, (h,), jnp.float32, -bound1, bound1)
    fc2_w = jax.random.uniform(kw2, (ydim, h), jnp.float32, -bound2, bound2)
    fc2_b = jax.random.uniform(kb2, (ydim,), jnp.float32, -bound2, bound2)

    # One-time parameter preparation (outside the per-call hot path).
    params_f32 = prepare_stimnet_params(fc1_w, fc1_b, fc2_w, fc2_b)
    params_bf16 = prepare_stimnet_params(fc1_w, fc1_b, fc2_w, fc2_b, use_bf16=True)

    # 1) Small batch -> single-invocation (no-grid) f32 path, no padding at all.
    B = 8
    x = jax.random.normal(kx, (B, xdim), dtype=jnp.float32)
    ref = stimnet_reference(x, fc1_w, fc1_b, fc2_w, fc2_b)
    out = jax.block_until_ready(stimnet_forward(x, params_f32))
    assert out.shape == (B, ydim)
    assert jnp.allclose(out, ref, atol=1e-5, rtol=1e-5)

    # 2) Batch-tiled path with a ragged batch (48 rows, tile 16, even grid of 4;
    #    batch padded to 64 for the kernel and sliced back).  Exact f32.
    B2 = 48
    x2 = jax.random.normal(kx2, (B2, xdim), dtype=jnp.float32)
    ref2 = stimnet_reference(x2, fc1_w, fc1_b, fc2_w, fc2_b)
    out2 = jax.block_until_ready(stimnet_forward(x2, params_f32, block_b=16))
    assert out2.shape == (B2, ydim)
    assert jnp.allclose(out2, ref2, atol=1e-5, rtol=1e-5)

    # 3) Batch-tiled path, exactly divisible (no pad, no post-kernel slice).
    B3 = 64
    x3 = jax.random.normal(kx3, (B3, xdim), dtype=jnp.float32)
    ref3 = stimnet_reference(x3, fc1_w, fc1_b, fc2_w, fc2_b)
    out3 = jax.block_until_ready(stimnet_forward(x3, params_f32, block_b=16))
    assert out3.shape == (B3, ydim)
    assert jnp.allclose(out3, ref3, atol=1e-5, rtol=1e-5)

    # 4) bf16 MXU-operand path (f32 accumulation) - valid on v5e/v6e/v7x.
    out4 = jax.block_until_ready(stimnet_forward(x, params_bf16))
    assert out4.shape == (B, ydim)
    assert jnp.allclose(out4, ref, atol=5e-2, rtol=5e-2)

    # 5) bf16 output dtype (halves output write traffic), batch-tiled path.
    out5 = jax.block_until_ready(
        stimnet_forward(x2, params_bf16, block_b=16, out_dtype=jnp.bfloat16))
    assert out5.shape == (B2, ydim) and out5.dtype == jnp.bfloat16
    assert jnp.allclose(out5.astype(jnp.float32), ref2, atol=5e-2, rtol=5e-2)

    print("KERNEL_OK")
</pallas_src>

<mosaic_0001>
module attributes {stable_mosaic.version = 11 : i64} {
  func.func @stimnet_kernel(%arg0: memref<8x16xf32, #tpu.memory_space<vmem>>, %arg1: memref<16x32xf32, #tpu.memory_space<vmem>>, %arg2: memref<1x32xf32, #tpu.memory_space<vmem>>, %arg3: memref<32x4xf32, #tpu.memory_space<vmem>>, %arg4: memref<1x4xf32, #tpu.memory_space<vmem>>, %arg5: memref<8x4xf32, #tpu.memory_space<vmem>>) attributes {dimension_semantics = [], scalar_prefetch = 0 : i64, scratch_operands = 0 : i64, tpu.core_type = #tpu.core_type<tc>} {
    %c0 = arith.constant 0 : index
    %c0_0 = arith.constant 0 : index
    %0 = vector.load %arg0[%c0, %c0_0] : memref<8x16xf32, #tpu.memory_space<vmem>>, vector<8x16xf32>
    %c0_1 = arith.constant 0 : index
    %c0_2 = arith.constant 0 : index
    %1 = vector.load %arg1[%c0_1, %c0_2] : memref<16x32xf32, #tpu.memory_space<vmem>>, vector<16x32xf32>
    %cst = arith.constant dense<0.000000e+00> : vector<8x32xf32>
    %2 = tpu.matmul %0, %1, %cst {dimension_numbers = #tpu.dot_dimension_numbers<[1], [0], [0], [1], [0, 0, 1, 1], [], []>} : vector<8x16xf32>, vector<16x32xf32>, vector<8x32xf32> -> vector<8x32xf32>
    %c0_3 = arith.constant 0 : index
    %c0_4 = arith.constant 0 : index
    %3 = vector.load %arg2[%c0_3, %c0_4] : memref<1x32xf32, #tpu.memory_space<vmem>>, vector<1x32xf32>
    %4 = vector.broadcast %3 : vector<1x32xf32> to vector<8x32xf32>
    %5 = arith.addf %2, %4 : vector<8x32xf32>
    %cst_5 = arith.constant 0.000000e+00 : f32
    %6 = vector.broadcast %cst_5 : f32 to vector<8x32xf32>
    %7 = arith.maximumf %5, %6 : vector<8x32xf32>
    %c0_6 = arith.constant 0 : index
    %c0_7 = arith.constant 0 : index
    %8 = vector.load %arg3[%c0_6, %c0_7] : memref<32x4xf32, #tpu.memory_space<vmem>>, vector<32x4xf32>
    %cst_8 = arith.constant dense<0.000000e+00> : vector<8x4xf32>
    %9 = tpu.matmul %7, %8, %cst_8 {dimension_numbers = #tpu.dot_dimension_numbers<[1], [0], [0], [1], [0, 0, 1, 1], [], []>} : vector<8x32xf32>, vector<32x4xf32>, vector<8x4xf32> -> vector<8x4xf32>
    %c0_9 = arith.constant 0 : index
    %c0_10 = arith.constant 0 : index
    %10 = vector.load %arg4[%c0_9, %c0_10] : memref<1x4xf32, #tpu.memory_space<vmem>>, vector<1x4xf32>
    %11 = vector.broadcast %10 : vector<1x4xf32> to vector<8x4xf32>
    %12 = arith.addf %9, %11 : vector<8x4xf32>
    %c0_11 = arith.constant 0 : index
    %c0_12 = arith.constant 0 : index
    %13 = vector.load %arg5[%c0_11, %c0_12] : memref<8x4xf32, #tpu.memory_space<vmem>>, vector<8x4xf32>
    tpu.vector_store %arg5[%c0_11, %c0_12], %12 {strides = array<i32>} : memref<8x4xf32, #tpu.memory_space<vmem>>, vector<8x4xf32>,
    return
  }
}

</mosaic_0001>

<llo_original>
// kernel: tpu_custom_call.1
$region0: #{tpu_custom_call.1}
  #allocation0 [shape = 'u32[]', space=smem, size = 0x4, offset = 0x4, fixed_abs, tag = 'smem constant byte address 0x4 - core index']
  #allocation1 [shape = 'u32[144,128]{1,0:T(1,128)}', space=vmem, size = 0x12000, scoped, tag = 'internal scratch']
  %s0 = inlined_call_operand.vmem [shape: f32[8,16], index: 0, kind: input, shape index: {}]
  %s1 = inlined_call_operand.vmem [shape: f32[16,32], index: 1, kind: input, shape index: {}]
  %s2 = inlined_call_operand.vmem [shape: f32[1,32], index: 2, kind: input, shape index: {}]
  %s3 = inlined_call_operand.vmem [shape: f32[32,4], index: 3, kind: input, shape index: {}]
  %s4 = inlined_call_operand.vmem [shape: f32[1,4], index: 4, kind: input, shape index: {}]
  %s5 = inlined_call_operand.vmem [shape: f32[8,4], index: 5, kind: output, shape index: {}]
  %s6 = sld [smem:[#allocation0]]
  $region30: #{tpu_custom_call.1} parent=0
    _
  %s8 = ssub.s32 1, %s6
  %s9 = scalar_select 0, %s8, %s6
  // Predicated region
  $region2: #{tpu_custom_call.1} parent=0 // pred_check
    _
  $region3: #{tpu_custom_call.1} parent=0 // pred_check_branch
    %11 = sbr.rel (0) target = $region5
  $region4: #{tpu_custom_call.1} parent=0 // pred_region
    _
  $region5: #{tpu_custom_call.1} parent=0 // pred_fallthru
    _
  // Predicated region
  $region6: #{tpu_custom_call.1} parent=0 // pred_check
    _
  $region7: #{tpu_custom_call.1} parent=0 // pred_check_branch
    %13 = sbr.rel (0) target = $region9
  $region8: #{tpu_custom_call.1} parent=0 // pred_region
    _
  $region9: #{tpu_custom_call.1} parent=0 // pred_fallthru
    _
  // Predicated region
  $region10: #{tpu_custom_call.1} parent=0 // pred_check
    _
  $region11: #{tpu_custom_call.1} parent=0 // pred_check_branch
    %15 = sbr.rel (0) target = $region13
  $region12: #{tpu_custom_call.1} parent=0 // pred_region
    _
  $region13: #{tpu_custom_call.1} parent=0 // pred_fallthru
    _
  // Predicated region
  $region14: #{tpu_custom_call.1} parent=0 // pred_check
    _
  $region15: #{tpu_custom_call.1} parent=0 // pred_check_branch
    %17 = sbr.rel (0) target = $region17
  $region16: #{tpu_custom_call.1} parent=0 // pred_region
    _
  $region17: #{tpu_custom_call.1} parent=0 // pred_fallthru
    _
  // Predicated region
  $region18: #{tpu_custom_call.1} parent=0 // pred_check
    _
  $region19: #{tpu_custom_call.1} parent=0 // pred_check_branch
    %19 = sbr.rel (0) target = $region21
  $region20: #{tpu_custom_call.1} parent=0 // pred_region
    _
  $region21: #{tpu_custom_call.1} parent=0 // pred_fallthru
    _
  %v20 = vld [vmem:[%s0] sm:$0xff]
  %v21 = vld [vmem:[%s1] sm:$0xff]
  %v22 = vld [vmem:[%s1 + $0x8] sm:$0xff]
  %v23 = vld [vmem:[%s2] sm:$0x1]
  %v25 = vlaneseq
  %v26 = vshrl.u32 %v25, 7
  %v27 = vsub.s32 0, %v26
  %v28 = vrot.slane %v23, %v27
  %vm30 = vcmask 130048
  %v32 = vsel %vm30, %v20, 0
  %34 = vmatprep.subr.mxu0 0.0
  %35 = vmatpush1.msra.mxu0 %v21
  %36 = vmatprep.subr.mxu0 0.0
  %37 = vmatpush1.msra.mxu0 %v22
  %38 = vmatprep.subr.mxu0 0.0
  %39 = vmatpush1.msra.mxu0 0.0
  %40 = vmatprep.subr.mxu0 0.0
  %41 = vmatpush1.msra.mxu0 0.0
  %42 = vmatprep.subr.mxu0 0.0
  %43 = vmatpush1.msra.mxu0 0.0
  %44 = vmatprep.subr.mxu0 0.0
  %45 = vmatpush1.msra.mxu0 0.0
  %46 = vmatprep.subr.mxu0 0.0
  %47 = vmatpush1.msra.mxu0 0.0
  %48 = vmatprep.subr.mxu0 0.0
  %49 = vmatpush1.msra.mxu0 0.0
  %50 = vmatprep.subr.mxu0 0.0
  %51 = vmatpush1.msra.mxu0 0.0
  %52 = vmatprep.subr.mxu0 0.0
  %53 = vmatpush1.msra.mxu0 0.0
  %54 = vmatprep.subr.mxu0 0.0
  %55 = vmatpush1.msra.mxu0 0.0
  %56 = vmatprep.subr.mxu0 0.0
  %57 = vmatpush1.msra.mxu0 0.0
  %58 = vmatprep.subr.mxu0 0.0
  %59 = vmatpush1.msra.mxu0 0.0
  %60 = vmatprep.subr.mxu0 0.0
  %61 = vmatpush1.msra.mxu0 0.0
  %62 = vmatprep.subr.mxu0 0.0
  %63 = vmatpush1.msra.mxu0 0.0
  %64 = vmatprep.subr.mxu0 0.0
  %65 = vmatpush1.msra.mxu0 0.0
  %66 = vmatprep.subr.mxu0 0.0
  %67 = vmatpush1.msra.mxu0 0.0
  %68 = vmatprep.subr.mxu0 0.0
  %69 = vmatpush1.msra.mxu0 0.0
  %70 = vmatprep.subr.mxu0 0.0
  %71 = vmatpush1.msra.mxu0 0.0
  %72 = vmatprep.subr.mxu0 0.0
  %73 = vmatpush1.msra.mxu0 0.0
  %74 = vmatprep.subr.mxu0 0.0
  %75 = vmatpush1.msra.mxu0 0.0
  %76 = vmatprep.subr.mxu0 0.0
  %77 = vmatpush1.msra.mxu0 0.0
  %78 = vmatprep.subr.mxu0 0.0
  %79 = vmatpush1.msra.mxu0 0.0
  %80 = vmatprep.subr.mxu0 0.0
  %81 = vmatpush1.msra.mxu0 0.0
  %82 = vmatprep.subr.mxu0 0.0
  %83 = vmatpush1.msra.mxu0 0.0
  %84 = vmatprep.subr.mxu0 0.0
  %85 = vmatpush1.msra.mxu0 0.0
  %86 = vmatprep.subr.mxu0 0.0
  %87 = vmatpush1.msra.mxu0 0.0
  %88 = vmatprep.subr.mxu0 0.0
  %89 = vmatpush1.msra.mxu0 0.0
  %90 = vmatprep.subr.mxu0 0.0
  %91 = vmatpush1.msra.mxu0 0.0
  %92 = vmatprep.subr.mxu0 0.0
  %93 = vmatpush1.msra.mxu0 0.0
  %94 = vmatprep.subr.mxu0 0.0
  %95 = vmatpush1.msra.mxu0 0.0
  %96 = vmatprep.subr.mxu0 0.0
  %97 = vmatpush1.msra.mxu0 0.0
  %98 = vmatprep.mubr.f32.mxu0 0.0
  %99 = vmatmul.mubr.f32.gmra.mrb[0].mxu0 %v32
  %v100 = vpop.f32.mrb[0].mxu0
  %v101 = vadd.f32 %v28, %v100
  %v102 = vpop.f32.mrb[0].mxu0
  %103 = vdwg.mxu0
  %v104 = vmax.f32 %v101, 0.0
  %v105 = vld [vmem:[%s3] sm:$0xff]
  %v106 = vld [vmem:[%s3 + $0x8] sm:$0xff]
  %v107 = vld [vmem:[%s3 + $0x10] sm:$0xff]
  %v108 = vld [vmem:[%s3 + $0x18] sm:$0xff]
  %v109 = vld [vmem:[%s4] sm:$0x1]
  %v111 = vlaneseq
  %v112 = vshrl.u32 %v111, 7
  %v113 = vsub.s32 0, %v112
  %v114 = vrot.slane %v109, %v113
  %vm116 = vcmask 261120
  %v118 = vsel %vm116, %v104, 0
  %120 = vmatprep.subr.mxu0 0.0
  %121 = vmatpush1.msra.mxu0 %v105
  %122 = vmatprep.subr.mxu0 0.0
  %123 = vmatpush1.msra.mxu0 %v106
  %124 = vmatprep.subr.mxu0 0.0
  %125 = vmatpush1.msra.mxu0 %v107
  %126 = vmatprep.subr.mxu0 0.0
  %127 = vmatpush1.msra.mxu0 %v108
  %128 = vmatprep.subr.mxu0 0.0
  %129 = vmatpush1.msra.mxu0 0.0
  %130 = vmatprep.subr.mxu0 0.0
  %131 = vmatpush1.msra.mxu0 0.0
  %132 = vmatprep.subr.mxu0 0.0
  %133 = vmatpush1.msra.mxu0 0.0
  %134 = vmatprep.subr.mxu0 0.0
  %135 = vmatpush1.msra.mxu0 0.0
  %136 = vmatprep.subr.mxu0 0.0
  %137 = vmatpush1.msra.mxu0 0.0
  %138 = vmatprep.subr.mxu0 0.0
  %139 = vmatpush1.msra.mxu0 0.0
  %140 = vmatprep.subr.mxu0 0.0
  %141 = vmatpush1.msra.mxu0 0.0
  %142 = vmatprep.subr.mxu0 0.0
  %143 = vmatpush1.msra.mxu0 0.0
  %144 = vmatprep.subr.mxu0 0.0
  %145 = vmatpush1.msra.mxu0 0.0
  %146 = vmatprep.subr.mxu0 0.0
  %147 = vmatpush1.msra.mxu0 0.0
  %148 = vmatprep.subr.mxu0 0.0
  %149 = vmatpush1.msra.mxu0 0.0
  %150 = vmatprep.subr.mxu0 0.0
  %151 = vmatpush1.msra.mxu0 0.0
  %152 = vmatprep.subr.mxu0 0.0
  %153 = vmatpush1.msra.mxu0 0.0
  %154 = vmatprep.subr.mxu0 0.0
  %155 = vmatpush1.msra.mxu0 0.0
  %156 = vmatprep.subr.mxu0 0.0
  %157 = vmatpush1.msra.mxu0 0.0
  %158 = vmatprep.subr.mxu0 0.0
  %159 = vmatpush1.msra.mxu0 0.0
  %160 = vmatprep.subr.mxu0 0.0
  %161 = vmatpush1.msra.mxu0 0.0
  %162 = vmatprep.subr.mxu0 0.0
  %163 = vmatpush1.msra.mxu0 0.0
  %164 = vmatprep.subr.mxu0 0.0
  %165 = vmatpush1.msra.mxu0 0.0
  %166 = vmatprep.subr.mxu0 0.0
  %167 = vmatpush1.msra.mxu0 0.0
  %168 = vmatprep.subr.mxu0 0.0
  %169 = vmatpush1.msra.mxu0 0.0
  %170 = vmatprep.subr.mxu0 0.0
  %171 = vmatpush1.msra.mxu0 0.0
  %172 = vmatprep.subr.mxu0 0.0
  %173 = vmatpush1.msra.mxu0 0.0
  %174 = vmatprep.subr.mxu0 0.0
  %175 = vmatpush1.msra.mxu0 0.0
  %176 = vmatprep.subr.mxu0 0.0
  %177 = vmatpush1.msra.mxu0 0.0
  %178 = vmatprep.subr.mxu0 0.0
  %179 = vmatpush1.msra.mxu0 0.0
  %180 = vmatprep.subr.mxu0 0.0
  %181 = vmatpush1.msra.mxu0 0.0
  %182 = vmatprep.subr.mxu0 0.0
  %183 = vmatpush1.msra.mxu0 0.0
  %184 = vmatprep.mubr.f32.mxu0 0.0
  %185 = vmatmul.mubr.f32.gmra.mrb[0].mxu0 %v118
  %v186 = vpop.f32.mrb[0].mxu0
  %v187 = vadd.f32 %v114, %v186
  %v188 = vpop.f32.mrb[0].mxu0
  %189 = vdwg.mxu0
  %vm190 = vcmask 31744
  %191 = vst.msk [vmem:[%s5] sm:$0xff] %vm190, %v187
  // Predicated region
  $region22: #{tpu_custom_call.1} parent=0 // pred_check
    _
  $region23: #{tpu_custom_call.1} parent=0 // pred_check_branch
    %193 = sbr.rel (0) target = $region25
  $region24: #{tpu_custom_call.1} parent=0 // pred_region
    _
  $region25: #{tpu_custom_call.1} parent=0 // pred_fallthru
    _
  // Predicated region
  $region26: #{tpu_custom_call.1} parent=0 // pred_check
    _
  $region27: #{tpu_custom_call.1} parent=0 // pred_check_branch
    %195 = sbr.rel (0) target = $region29
  $region28: #{tpu_custom_call.1} parent=0 // pred_region
    _
  $region29: #{tpu_custom_call.1} parent=0 // pred_fallthru
    _

</llo_original>
